<compile_context>
chip_gen: v7x
topology: tpu7x:2x2x1
jax: 0.10.0
libtpu: 0.0.40
codegen_flags: <defaults>
</compile_context>

<pallas_src>
import jax
import jax.numpy as jnp
from jax import lax
from jax.experimental import pallas as pl
from jax.experimental.pallas import tpu as pltpu

LANE = 128                    # vreg lane width (last-dim tile)
SUBLANE = 8                   # f32 sublane tile
ROW_CHUNK = SUBLANE * LANE    # 1024: padding granularity of the flattened slab
TARGET_TILE_BYTES = 2 << 20   # ~2 MiB input tile per grid step


def _round_up(a: int, b: int) -> int:
    return ((a + b - 1) // b) * b


def _make_adv_loss_kernel(ragged_rows):
    """Build the streaming-reduction kernel body.

    ragged_rows: number of valid rows in the *last* grid block, or None when
    every block is fully covered by the (rows8, 128) slab.
    """

    def kernel(x_ref, out_ref):
        s = pl.program_id(0)
        t = pl.program_id(1)

        @pl.when(t == 0)
        def _():
            out_ref[...] = jnp.zeros_like(out_ref)

        d = x_ref[...].astype(jnp.float32) - 1.0
        sq = d * d

        def fold(v):
            # (block_rows, 128) -> (block_rows//8, 8, 128): tile-aligned
            # reshape; sum over axis 0 is pure vreg adds on the VPU (no XLU).
            return jnp.sum(v.reshape(-1, SUBLANE, LANE), axis=0)

        if ragged_rows is None:
            out_ref[...] += fold(sq)
        else:
            is_last = jnp.logical_and(s == pl.num_programs(0) - 1,
                                      t == pl.num_programs(1) - 1)

            @pl.when(is_last)
            def _():
                # Mask the rows past the end of the slab (clamped DMA leaves
                # unspecified data there); select-to-zero never propagates NaN.
                row = lax.broadcasted_iota(jnp.int32, sq.shape, 0)
                out_ref[...] += fold(jnp.where(row < ragged_rows, sq, 0.0))

            @pl.when(jnp.logical_not(is_last))
            def _():
                out_ref[...] += fold(sq)

    return kernel


def adversarial_loss(fake_outputs, *, min_pallas_elems: int = 1 << 20,
                     max_block_rows: int | None = None):
    """loss = mean((fake_outputs - 1)^2 / 2), matching the PyTorch forward.

    max_block_rows: optional tile-row override (multiple of 8) for tuning/tests.
    """
    x = jnp.reshape(fake_outputs, (-1,))
    n = x.size

    if n == 0:
        return jnp.float32(jnp.nan)  # torch.mean of an empty tensor is NaN

    if n < min_pallas_elems:
        # Tiny discriminator maps: XLA's fused reduction already hits roofline;
        # the pallas_call launch + pad/reshape would dominate.
        xf = x.astype(jnp.float32)
        return jnp.mean((xf - 1.0) ** 2) * 0.5

    # Lane-dense (rows8, 128) slab; pad only to the 1024-element (8x128)
    # granularity with the neutral value 1.0 ((1 - 1)^2 == 0).
    padded = _round_up(n, ROW_CHUNK)
    if padded != n:
        x = jnp.pad(x, (0, padded - n), constant_values=1.0)
    rows8 = padded // LANE            # always a multiple of 8
    x2d = x.reshape(rows8, LANE)

    itemsize = jnp.dtype(x2d.dtype).itemsize
    if max_block_rows is None:
        max_block_rows = max(
            SUBLANE,
            (TARGET_TILE_BYTES // (LANE * itemsize)) // SUBLANE * SUBLANE)
    block_rows = min(max_block_rows, rows8)
    n_blocks = -(-rows8 // block_rows)

    # Feed both TensorCores on 2-TC chips (v7x) only when the block count
    # splits evenly, so the outer split never adds padded / out-of-range
    # blocks on single-TC v5e/v6e.
    splits = 2 if (n_blocks >= 2 and n_blocks % 2 == 0) else 1
    inner = n_blocks // splits

    covered_rows = n_blocks * block_rows
    ragged_rows = None
    if covered_rows != rows8:
        ragged_rows = block_rows - (covered_rows - rows8)  # valid rows in last block

    tile_bytes = block_rows * LANE * itemsize
    # Double-buffered input tile + output blocks + headroom.
    vmem_limit = int(min(64 << 20, max(16 << 20, 2 * tile_bytes + (4 << 20))))

    kernel = _make_adv_loss_kernel(ragged_rows)

    partials = pl.pallas_call(
        kernel,
        out_shape=jax.ShapeDtypeStruct((splits * SUBLANE, LANE), jnp.float32),
        grid_spec=pltpu.PrefetchScalarGridSpec(
            num_scalar_prefetch=0,
            grid=(splits, inner),
            in_specs=[
                pl.BlockSpec((block_rows, LANE), lambda s, t: (s * inner + t, 0)),
            ],
            out_specs=pl.BlockSpec((SUBLANE, LANE), lambda s, t: (s, 0)),
        ),
        compiler_params=pltpu.CompilerParams(
            dimension_semantics=("parallel", "arbitrary"),
            vmem_limit_bytes=vmem_limit,
        ),
    )(x2d)

    # Final tiny reduction (<= 2048 f32) + normalization outside the kernel.
    return jnp.sum(partials) * (0.5 / n)


def adversarial_loss_ref(fake_outputs):
    """Pure-JAX reference mirroring the PyTorch forward."""
    f = jnp.asarray(fake_outputs, dtype=jnp.float32)
    return jnp.mean((f - 1.0) ** 2 / 2.0)


if __name__ == "__main__":
    key = jax.random.PRNGKey(0)
    k0, k1, k2 = jax.random.split(key, 3)

    # Small discriminator output map, NCHW.
    fake = jax.random.normal(k0, (2, 4, 16, 16), dtype=jnp.float32)
    ref = adversarial_loss_ref(fake)

    # 1) Force the Pallas streaming-reduction path (single block, no ragged tail).
    loss_kernel = jax.block_until_ready(adversarial_loss(fake, min_pallas_elems=0))
    assert jnp.allclose(loss_kernel, ref, rtol=1e-5, atol=1e-6), (loss_kernel, ref)

    # 2) Default dispatch: small input takes the fused-XLA fast path.
    loss_auto = jax.block_until_ready(adversarial_loss(fake))
    assert jnp.allclose(loss_auto, ref, rtol=1e-5, atol=1e-6), (loss_auto, ref)

    # 3) Multi-block + ragged-last-block path (small shape, tiny tile override).
    fake2 = jax.random.normal(k1, (2, 3, 40, 40), dtype=jnp.float32)  # 9600 elems
    loss2 = jax.block_until_ready(
        adversarial_loss(fake2, min_pallas_elems=0, max_block_rows=32))
    ref2 = adversarial_loss_ref(fake2)
    assert jnp.allclose(loss2, ref2, rtol=1e-5, atol=1e-6), (loss2, ref2)

    # 4) Even block count -> outer split path (and a bf16 input).
    fake3 = jax.random.normal(k2, (2, 4, 32, 32), dtype=jnp.bfloat16)  # 8192 elems
    loss3 = jax.block_until_ready(
        adversarial_loss(fake3, min_pallas_elems=0, max_block_rows=16))
    ref3 = adversarial_loss_ref(fake3)
    assert jnp.allclose(loss3, ref3, rtol=1e-5, atol=1e-6), (loss3, ref3)

    print("KERNEL_OK")
</pallas_src>

<mosaic_0001>
module attributes {stable_mosaic.version = 11 : i64} {
  func.func @kernel(%arg0: i32, %arg1: i32, %arg2: memref<16x128xf32, #tpu.memory_space<vmem>>, %arg3: memref<8x128xf32, #tpu.memory_space<vmem>>) attributes {dimension_semantics = [#tpu.dimension_semantics<parallel>, #tpu.dimension_semantics<arbitrary>], iteration_bounds = array<i64: 1, 1>, scalar_prefetch = 0 : i64, scratch_operands = 0 : i64, tpu.core_type = #tpu.core_type<tc>, window_params = [{transform_indices = @transform_0, window_bounds = array<i64: 16, 128>}, {transform_indices = @transform_1, window_bounds = array<i64: 8, 128>}]} {
    %c0_i32 = arith.constant 0 : i32
    %0 = arith.cmpi eq, %arg1, %c0_i32 : i32
    %1 = arith.extui %0 : i1 to i32
    %c0_i32_0 = arith.constant 0 : i32
    %2 = arith.cmpi ne, %1, %c0_i32_0 : i32
    scf.if %2 {
      %cst_7 = arith.constant 0.000000e+00 : f32
      %12 = vector.broadcast %cst_7 : f32 to vector<8x128xf32>
      %c0_8 = arith.constant 0 : index
      %c0_9 = arith.constant 0 : index
      %13 = vector.load %arg3[%c0_8, %c0_9] : memref<8x128xf32, #tpu.memory_space<vmem>>, vector<8x128xf32>
      tpu.vector_store %arg3[%c0_8, %c0_9], %12 {strides = array<i32>} : memref<8x128xf32, #tpu.memory_space<vmem>>, vector<8x128xf32>,
    } else {
    }
    %c0 = arith.constant 0 : index
    %c0_1 = arith.constant 0 : index
    %3 = vector.load %arg2[%c0, %c0_1] : memref<16x128xf32, #tpu.memory_space<vmem>>, vector<16x128xf32>
    %cst = arith.constant 1.000000e+00 : f32
    %4 = vector.broadcast %cst : f32 to vector<16x128xf32>
    %5 = arith.subf %3, %4 : vector<16x128xf32>
    %6 = arith.mulf %5, %5 : vector<16x128xf32>
    %c0_2 = arith.constant 0 : index
    %c0_3 = arith.constant 0 : index
    %7 = vector.load %arg3[%c0_2, %c0_3] : memref<8x128xf32, #tpu.memory_space<vmem>>, vector<8x128xf32>
    %8 = vector.shape_cast %6 : vector<16x128xf32> to vector<2x8x128xf32>
    %cst_4 = arith.constant dense<0.000000e+00> : vector<8x128xf32>
    %9 = vector.multi_reduction <add>, %8, %cst_4 [0] : vector<2x8x128xf32> to vector<8x128xf32>
    %10 = arith.addf %7, %9 : vector<8x128xf32>
    %c0_5 = arith.constant 0 : index
    %c0_6 = arith.constant 0 : index
    %11 = vector.load %arg3[%c0_5, %c0_6] : memref<8x128xf32, #tpu.memory_space<vmem>>, vector<8x128xf32>
    tpu.vector_store %arg3[%c0_5, %c0_6], %10 {strides = array<i32>} : memref<8x128xf32, #tpu.memory_space<vmem>>, vector<8x128xf32>,
    return
  }
  func.func @transform_0(%arg0: i32, %arg1: i32) -> (i32, i32) {
    %c1_i32 = arith.constant 1 : i32
    %0 = arith.muli %arg0, %c1_i32 : i32
    %1 = arith.addi %0, %arg1 : i32
    %c0_i32 = arith.constant 0 : i32
    %c0_i32_0 = arith.constant 0 : i32
    return %1, %c0_i32 : i32, i32
  }
  func.func @transform_1(%arg0: i32, %arg1: i32) -> (i32, i32) {
    %c0_i32 = arith.constant 0 : i32
    %c0_i32_0 = arith.constant 0 : i32
    return %arg0, %c0_i32 : i32, i32
  }
}

</mosaic_0001>

<llo_original>
// kernel: tpu_custom_call.1
$region0: #{tpu_custom_call.1}
  #allocation0 [shape = 'u32[]', space=smem, size = 0x4, offset = 0x4, fixed_abs, tag = 'smem constant byte address 0x4 - core index']
  #allocation1 [shape = 'u32[144,128]{1,0:T(1,128)}', space=vmem, size = 0x12000, scoped, tag = 'internal scratch']
  %s0 = inlined_call_operand.hbm [shape: f32[16,128], index: 0, kind: input, shape index: {}]
  %s1 = inlined_call_operand.hbm [shape: f32[8,128], index: 1, kind: output, shape index: {}]
  %s2 = sld [smem:[#allocation0]]
  $region22: #{tpu_custom_call.1} parent=0
    _
  %s4 = ssub.s32 1, %s2
  %s5 = scalar_select 0, %s4, %s2
  $region1: #{tpu_custom_call.1} parent=0
    #allocation2 [shape = 'u8[8192]{0}', space=vmem, size = 0x2000, scoped, tag = 'input window, operand 0, single buffered']
    #allocation3 [shape = 's32[1]{0}', space=sflag, size = 0x4, scoped, tag = 'scoped memory for tpu_custom_call.1']
    #allocation4 [shape = 's32[1]{0}', space=sflag, size = 0x4, scoped, tag = 'scoped memory for tpu_custom_call.1']
    #allocation5 [shape = 'u8[4096]{0}', space=vmem, size = 0x1000, scoped, tag = 'output window, operand 0, single buffered']
    %6 = vsyncpa [#allocation3], 0
    %7 = vsyncpa [#allocation4], 0
    // Predicated region
    $region2: #{tpu_custom_call.1} parent=1 // pred_check
      _
    $region3: #{tpu_custom_call.1} parent=1 // pred_check_branch
      %9 = sbr.rel (0) target = $region5
    $region4: #{tpu_custom_call.1} parent=1 // pred_region
      %s10 = sadd.s32 0, 0
      %s11 = smul.u32 2, %s10
      %s13 = ssub.s32 256, 256
      %14 = vsyncadd [#allocation3], %s13
      %s15 = smul.addr %s11, 128
      %s16 = scalar_lea.hbm %s0, %s15
      %s17 = sshll.u32 [#allocation2], 4
      %s18 = int_to_ptr.vmem [resolvable:$true] %s17
      %23 = dma.hbm_to_vmem [thread:$0]  %s16, 256, %s18, [#allocation3], 128, 128, 8
    $region5: #{tpu_custom_call.1} parent=1 // pred_fallthru
      _
    // Predicated region
    $region6: #{tpu_custom_call.1} parent=1 // pred_check
      _
    $region7: #{tpu_custom_call.1} parent=1 // pred_check_branch
      %25 = sbr.rel (0) target = $region9
    $region8: #{tpu_custom_call.1} parent=1 // pred_region
      %26 = dma.done [#allocation3], 256
    $region9: #{tpu_custom_call.1} parent=1 // pred_fallthru
      _
    %s27 = sadd.s32 0, 0
    %s28 = smul.u32 2, %s27
    %p29 = scmp.eq.s32.totalorder 0, 0
    // Predicated region
    $region10: #{tpu_custom_call.1} parent=1 // pred_check
      %p30 = pneg %p29
    $region11: #{tpu_custom_call.1} parent=1 // pred_check_branch
      %32 = sbr.rel (%p30) target = $region13
    $region12: #{tpu_custom_call.1} parent=1 // pred_region
      %33 = vst [vmem:[#allocation5] sm:$0xff] 0.0
    $region13: #{tpu_custom_call.1} parent=1 // pred_fallthru
      _
    %v34 = vld [vmem:[#allocation2] sm:$0xff]
    %v35 = vld [vmem:[#allocation2 + $0x8] sm:$0xff]
    %v36 = vsub.f32 %v34, 1.0
    %v37 = vsub.f32 %v35, 1.0
    %v38 = vmul.f32 %v36, %v36
    %v39 = vmul.f32 %v37, %v37
    %v40 = vld [vmem:[#allocation5] sm:$0xff]
    %v41 = vadd.f32 %v38, %v39
    %v42 = vadd.f32 %v40, %v41
    %43 = vst [vmem:[#allocation5] sm:$0xff] %v42
    // Predicated region
    $region14: #{tpu_custom_call.1} parent=1 // pred_check
      _
    $region15: #{tpu_custom_call.1} parent=1 // pred_check_branch
      %45 = sbr.rel (0) target = $region17
    $region16: #{tpu_custom_call.1} parent=1 // pred_region
      %s47 = ssub.s32 128, 128
      %48 = vsyncadd [#allocation4], %s47
      %s50 = sshll.u32 [#allocation5], 4
      %s51 = int_to_ptr.vmem [resolvable:$true] %s50
      %53 = dma.vmem_to_hbm [thread:$0]  %s51, 128, %s1, [#allocation4]
    $region17: #{tpu_custom_call.1} parent=1 // pred_fallthru
      _
    // Predicated region
    $region18: #{tpu_custom_call.1} parent=1 // pred_check
      _
    $region19: #{tpu_custom_call.1} parent=1 // pred_check_branch
      %55 = sbr.rel (0) target = $region21
    $region20: #{tpu_custom_call.1} parent=1 // pred_region
      %56 = dma.done [#allocation4], 128
    $region21: #{tpu_custom_call.1} parent=1 // pred_fallthru
      _
    %57 = vsyncpa [#allocation3], 1
    %58 = vsyncpa [#allocation4], 1

</llo_original>
